<compile_context>
chip_gen: v5e
topology: v5e:2x2
jax: 0.10.0
libtpu: 0.0.40
codegen_flags: <defaults>
</compile_context>

<pallas_src>
import jax
import jax.numpy as jnp
from jax.experimental import pallas as pl
from jax.experimental.pallas import tpu as pltpu


def _round_up(x, m):
    return ((x + m - 1) // m) * m


def arguments_net_kernel(x_ref, w1_ref, b1_ref, w2_ref, b2_ref, o_ref):
    # x: (TB, H); w1: (H, H/2); b1: (1, H/2); w2: (H/2, A_pad); b2: (1, A_pad)
    mm_dtype = w1_ref.dtype  # f32 or bf16 -- matmul inputs only
    x = x_ref[...]
    if x.dtype != mm_dtype:
        x = x.astype(mm_dtype)

    # l1 + ReLU: MXU matmul with f32 accumulation; bias-add / max on the VPU in f32.
    h = jnp.dot(x, w1_ref[...], preferred_element_type=jnp.float32) + b1_ref[...]
    h = jnp.maximum(h, 0.0)

    # l2: padded argument columns have zero weights and a -1e30 bias, so they
    # contribute exp(-huge) == 0 to the softmax.
    logits = jnp.dot(h.astype(mm_dtype), w2_ref[...],
                     preferred_element_type=jnp.float32) + b2_ref[...]

    # numerically-stable softmax over the (padded) argument axis.
    m = jnp.max(logits, axis=-1, keepdims=True)
    e = jnp.exp(logits - m)
    denom = jnp.sum(e, axis=-1, keepdims=True)
    inv = pl.reciprocal(denom, approx=False)   # EUP; keeps 1e-5 accuracy
    o_ref[...] = (e * inv).astype(o_ref.dtype)


def arguments_net(hidden_state, w1, b1, w2, b2, *, block_b=256,
                  matmul_dtype=jnp.float32):
    """hidden_state: (B, H) f32; w1: (H, H//2); b1: (1, H//2);
    w2: (H//2, A); b2: (1, A).  Returns (B, A) f32 softmax probabilities."""
    B, H = hidden_state.shape
    H2, A = w2.shape

    # ---- lane-dense output: pad argument axis up to a multiple of 128 ----
    A_pad = max(128, _round_up(A, 128))
    if A_pad != A:
        w2 = jnp.zeros((H2, A_pad), w2.dtype).at[:, :A].set(w2)
        b2 = jnp.full((1, A_pad), -1e30, b2.dtype).at[:, :A].set(b2)

    # ---- matmul-input dtype (bf16 halves weight DMA; biases stay f32) ----
    w1c = w1.astype(matmul_dtype)
    w2c = w2.astype(matmul_dtype)

    # ---- batch grid: TB rows per tile (multiple of 8); weights resident ----
    block_b = max(8, _round_up(block_b, 8))
    TB = min(block_b, _round_up(B, 8))
    B_pad = _round_up(B, TB)
    x = hidden_state
    if B_pad != B:
        x = jnp.zeros((B_pad, H), hidden_state.dtype).at[:B].set(hidden_state)

    out = pl.pallas_call(
        arguments_net_kernel,
        out_shape=jax.ShapeDtypeStruct((B_pad, A_pad), jnp.float32),
        grid=(B_pad // TB,),
        in_specs=[
            pl.BlockSpec((TB, H), lambda i: (i, 0)),      # x tile (pipelined)
            pl.BlockSpec((H, H2), lambda i: (0, 0)),      # W1 (resident)
            pl.BlockSpec((1, H2), lambda i: (0, 0)),      # b1 (resident)
            pl.BlockSpec((H2, A_pad), lambda i: (0, 0)),  # W2 (resident)
            pl.BlockSpec((1, A_pad), lambda i: (0, 0)),   # b2 (resident)
        ],
        out_specs=pl.BlockSpec((TB, A_pad), lambda i: (i, 0)),
        compiler_params=pltpu.CompilerParams(
            dimension_semantics=("parallel",)),           # 2 TCs on v7x
    )(x, w1c, b1, w2c, b2)

    return out[:B, :A]


def init_params(key, hidden_size, num_arguments=8):
    """Deterministic init mirroring torch.nn.Linear default (uniform +/- 1/sqrt(fan_in)),
    with weights stored as (in, out)."""
    h2 = hidden_size // 2
    k1, k2, k3, k4 = jax.random.split(key, 4)
    bound1 = 1.0 / jnp.sqrt(jnp.float32(hidden_size))
    bound2 = 1.0 / jnp.sqrt(jnp.float32(h2))
    w1 = jax.random.uniform(k1, (hidden_size, h2), jnp.float32, -bound1, bound1)
    b1 = jax.random.uniform(k2, (1, h2), jnp.float32, -bound1, bound1)
    w2 = jax.random.uniform(k3, (h2, num_arguments), jnp.float32, -bound2, bound2)
    b2 = jax.random.uniform(k4, (1, num_arguments), jnp.float32, -bound2, bound2)
    return w1, b1, w2, b2


def reference(hidden_state, w1, b1, w2, b2):
    x = jnp.maximum(hidden_state @ w1 + b1, 0.0)
    return jax.nn.softmax(x @ w2 + b2, axis=-1)


if __name__ == "__main__":
    key = jax.random.PRNGKey(0)
    k_param, k_x1, k_x2 = jax.random.split(key, 3)

    hidden_size = 32
    num_arguments = 8
    w1, b1, w2, b2 = init_params(k_param, hidden_size, num_arguments)

    # Small batch (typical ArgumentsNet use inside the NPI step loop).
    x_small = jax.random.normal(k_x1, (2, hidden_size), jnp.float32)
    out = jax.block_until_ready(arguments_net(x_small, w1, b1, w2, b2))
    ref = reference(x_small, w1, b1, w2, b2)
    assert out.shape == (2, num_arguments)
    assert jnp.allclose(out, ref, atol=1e-5, rtol=1e-5)
    assert jnp.allclose(jnp.sum(out, axis=-1), 1.0, atol=1e-5)

    # Larger, non-multiple-of-8 batch: exercises the batch grid + padding path.
    x_big = jax.random.normal(k_x2, (300, hidden_size), jnp.float32)
    out_big = jax.block_until_ready(
        arguments_net(x_big, w1, b1, w2, b2, block_b=128))
    ref_big = reference(x_big, w1, b1, w2, b2)
    assert out_big.shape == (300, num_arguments)
    assert jnp.allclose(out_big, ref_big, atol=1e-5, rtol=1e-5)
    assert jnp.allclose(jnp.sum(out_big, axis=-1), 1.0, atol=1e-5)

    # bf16 MXU-input path (v5e/v6e friendly); looser tolerance for bf16 weights.
    out_bf16 = jax.block_until_ready(
        arguments_net(x_big, w1, b1, w2, b2, block_b=128,
                      matmul_dtype=jnp.bfloat16))
    assert out_bf16.shape == (300, num_arguments)
    assert jnp.allclose(out_bf16, ref_big, atol=2e-2)
    assert jnp.allclose(jnp.sum(out_bf16, axis=-1), 1.0, atol=1e-3)

    print("KERNEL_OK")
</pallas_src>

<mosaic_0001>
module attributes {stable_mosaic.version = 11 : i64} {
  func.func @arguments_net_kernel(%arg0: i32, %arg1: memref<8x32xf32, #tpu.memory_space<vmem>>, %arg2: memref<32x16xf32, #tpu.memory_space<vmem>>, %arg3: memref<1x16xf32, #tpu.memory_space<vmem>>, %arg4: memref<16x128xf32, #tpu.memory_space<vmem>>, %arg5: memref<1x128xf32, #tpu.memory_space<vmem>>, %arg6: memref<8x128xf32, #tpu.memory_space<vmem>>) attributes {dimension_semantics = [#tpu.dimension_semantics<parallel>], iteration_bounds = array<i64: 1>, scalar_prefetch = 0 : i64, scratch_operands = 0 : i64, tpu.core_type = #tpu.core_type<tc>, window_params = [{transform_indices = @transform_0, window_bounds = array<i64: 8, 32>}, {pipeline_mode = #tpu.pipeline_mode<synchronous>, transform_indices = @transform_1, window_bounds = array<i64: 32, 16>}, {pipeline_mode = #tpu.pipeline_mode<synchronous>, transform_indices = @transform_2, window_bounds = array<i64: 1, 16>}, {pipeline_mode = #tpu.pipeline_mode<synchronous>, transform_indices = @transform_3, window_bounds = array<i64: 16, 128>}, {pipeline_mode = #tpu.pipeline_mode<synchronous>, transform_indices = @transform_4, window_bounds = array<i64: 1, 128>}, {transform_indices = @transform_5, window_bounds = array<i64: 8, 128>}]} {
    %c0 = arith.constant 0 : index
    %c0_0 = arith.constant 0 : index
    %0 = vector.load %arg1[%c0, %c0_0] : memref<8x32xf32, #tpu.memory_space<vmem>>, vector<8x32xf32>
    %c0_1 = arith.constant 0 : index
    %c0_2 = arith.constant 0 : index
    %1 = vector.load %arg2[%c0_1, %c0_2] : memref<32x16xf32, #tpu.memory_space<vmem>>, vector<32x16xf32>
    %cst = arith.constant dense<0.000000e+00> : vector<8x16xf32>
    %2 = tpu.matmul %0, %1, %cst {dimension_numbers = #tpu.dot_dimension_numbers<[1], [0], [0], [1], [0, 0, 1, 1], [], []>} : vector<8x32xf32>, vector<32x16xf32>, vector<8x16xf32> -> vector<8x16xf32>
    %c0_3 = arith.constant 0 : index
    %c0_4 = arith.constant 0 : index
    %3 = vector.load %arg3[%c0_3, %c0_4] : memref<1x16xf32, #tpu.memory_space<vmem>>, vector<1x16xf32>
    %4 = vector.broadcast %3 : vector<1x16xf32> to vector<8x16xf32>
    %5 = arith.addf %2, %4 : vector<8x16xf32>
    %cst_5 = arith.constant 0.000000e+00 : f32
    %6 = vector.broadcast %cst_5 : f32 to vector<8x16xf32>
    %7 = arith.maximumf %5, %6 : vector<8x16xf32>
    %c0_6 = arith.constant 0 : index
    %c0_7 = arith.constant 0 : index
    %8 = vector.load %arg4[%c0_6, %c0_7] : memref<16x128xf32, #tpu.memory_space<vmem>>, vector<16x128xf32>
    %cst_8 = arith.constant dense<0.000000e+00> : vector<8x128xf32>
    %9 = tpu.matmul %7, %8, %cst_8 {dimension_numbers = #tpu.dot_dimension_numbers<[1], [0], [0], [1], [0, 0, 1, 1], [], []>} : vector<8x16xf32>, vector<16x128xf32>, vector<8x128xf32> -> vector<8x128xf32>
    %c0_9 = arith.constant 0 : index
    %c0_10 = arith.constant 0 : index
    %10 = vector.load %arg5[%c0_9, %c0_10] : memref<1x128xf32, #tpu.memory_space<vmem>>, vector<1x128xf32>
    %11 = vector.broadcast %10 : vector<1x128xf32> to vector<8x128xf32>
    %12 = arith.addf %9, %11 : vector<8x128xf32>
    %cst_11 = arith.constant dense<0xFF800000> : vector<8xf32>
    %13 = vector.multi_reduction <maximumf>, %12, %cst_11 [1] : vector<8x128xf32> to vector<8xf32>
    %14 = vector.shape_cast %13 : vector<8xf32> to vector<8x1xf32>
    %15 = vector.broadcast %14 : vector<8x1xf32> to vector<8x128xf32>
    %16 = arith.subf %12, %15 : vector<8x128xf32>
    %17 = math.exp %16 : vector<8x128xf32>
    %cst_12 = arith.constant dense<0.000000e+00> : vector<8xf32>
    %18 = vector.multi_reduction <add>, %17, %cst_12 [1] : vector<8x128xf32> to vector<8xf32>
    %19 = vector.shape_cast %18 : vector<8xf32> to vector<8x1xf32>
    %20 = tpu.reciprocal %19 : vector<8x1xf32> -> vector<8x1xf32>
    %21 = vector.broadcast %20 : vector<8x1xf32> to vector<8x128xf32>
    %22 = arith.mulf %17, %21 : vector<8x128xf32>
    %c0_13 = arith.constant 0 : index
    %c0_14 = arith.constant 0 : index
    %23 = vector.load %arg6[%c0_13, %c0_14] : memref<8x128xf32, #tpu.memory_space<vmem>>, vector<8x128xf32>
    tpu.vector_store %arg6[%c0_13, %c0_14], %22 {strides = array<i32>} : memref<8x128xf32, #tpu.memory_space<vmem>>, vector<8x128xf32>,
    return
  }
  func.func @transform_0(%arg0: i32) -> (i32, i32) {
    %c0_i32 = arith.constant 0 : i32
    %c0_i32_0 = arith.constant 0 : i32
    return %arg0, %c0_i32 : i32, i32
  }
  func.func @transform_1(%arg0: i32) -> (i32, i32) {
    %c0_i32 = arith.constant 0 : i32
    %c0_i32_0 = arith.constant 0 : i32
    %c0_i32_1 = arith.constant 0 : i32
    return %c0_i32, %c0_i32_0 : i32, i32
  }
  func.func @transform_2(%arg0: i32) -> (i32, i32) {
    %c0_i32 = arith.constant 0 : i32
    %c0_i32_0 = arith.constant 0 : i32
    %c0_i32_1 = arith.constant 0 : i32
    return %c0_i32, %c0_i32_0 : i32, i32
  }
  func.func @transform_3(%arg0: i32) -> (i32, i32) {
    %c0_i32 = arith.constant 0 : i32
    %c0_i32_0 = arith.constant 0 : i32
    %c0_i32_1 = arith.constant 0 : i32
    return %c0_i32, %c0_i32_0 : i32, i32
  }
  func.func @transform_4(%arg0: i32) -> (i32, i32) {
    %c0_i32 = arith.constant 0 : i32
    %c0_i32_0 = arith.constant 0 : i32
    %c0_i32_1 = arith.constant 0 : i32
    return %c0_i32, %c0_i32_0 : i32, i32
  }
  func.func @transform_5(%arg0: i32) -> (i32, i32) {
    %c0_i32 = arith.constant 0 : i32
    %c0_i32_0 = arith.constant 0 : i32
    return %arg0, %c0_i32 : i32, i32
  }
}

</mosaic_0001>

<llo_original>
// kernel: tpu_custom_call.1
$region0: #{tpu_custom_call.1}
  #allocation0 [shape = 'u32[]', space=smem, size = 0x4, offset = 0x4, fixed_abs, tag = 'smem constant byte address 0x4 - core index']
  #allocation1 [shape = 'u32[72,128]{1,0:T(1,128)}', space=vmem, size = 0x9000, scoped, tag = 'internal scratch']
  %s0 = inlined_call_operand.vmem [shape: f32[8,32], index: 0, kind: input, shape index: {}]
  %s1 = inlined_call_operand.vmem [shape: f32[32,16], index: 1, kind: input, shape index: {}]
  %s2 = inlined_call_operand.vmem [shape: f32[1,16], index: 2, kind: input, shape index: {}]
  %s3 = inlined_call_operand.vmem [shape: f32[16,128], index: 3, kind: input, shape index: {}]
  %s4 = inlined_call_operand.vmem [shape: f32[1,128], index: 4, kind: input, shape index: {}]
  %s5 = inlined_call_operand.hbm [shape: f32[8,128], index: 5, kind: output, shape index: {}]
  %s6 = sld [smem:[#allocation0]]
  $region30: #{tpu_custom_call.1} parent=0
    _
  %s8 = ssub.s32 1, %s6
  %s9 = scalar_select 0, %s8, %s6
  $region1: #{tpu_custom_call.1} parent=0
    #allocation2 [shape = 'u8[4096]{0}', space=vmem, size = 0x1000, scoped, tag = 'output window, operand 0, single buffered']
    #allocation3 [shape = 's32[1]{0}', space=sflag, size = 0x4, scoped, tag = 'scoped memory for tpu_custom_call.1']
    %10 = vsyncpa [#allocation3], 0
    // Predicated region
    $region2: #{tpu_custom_call.1} parent=1 // pred_check
      _
    $region3: #{tpu_custom_call.1} parent=1 // pred_check_branch
      %12 = sbr.rel (0) target = $region5
    $region4: #{tpu_custom_call.1} parent=1 // pred_region
      _
    $region5: #{tpu_custom_call.1} parent=1 // pred_fallthru
      _
    // Predicated region
    $region6: #{tpu_custom_call.1} parent=1 // pred_check
      _
    $region7: #{tpu_custom_call.1} parent=1 // pred_check_branch
      %14 = sbr.rel (0) target = $region9
    $region8: #{tpu_custom_call.1} parent=1 // pred_region
      _
    $region9: #{tpu_custom_call.1} parent=1 // pred_fallthru
      _
    // Predicated region
    $region10: #{tpu_custom_call.1} parent=1 // pred_check
      _
    $region11: #{tpu_custom_call.1} parent=1 // pred_check_branch
      %16 = sbr.rel (0) target = $region13
    $region12: #{tpu_custom_call.1} parent=1 // pred_region
      _
    $region13: #{tpu_custom_call.1} parent=1 // pred_fallthru
      _
    // Predicated region
    $region14: #{tpu_custom_call.1} parent=1 // pred_check
      _
    $region15: #{tpu_custom_call.1} parent=1 // pred_check_branch
      %18 = sbr.rel (0) target = $region17
    $region16: #{tpu_custom_call.1} parent=1 // pred_region
      _
    $region17: #{tpu_custom_call.1} parent=1 // pred_fallthru
      _
    // Predicated region
    $region18: #{tpu_custom_call.1} parent=1 // pred_check
      _
    $region19: #{tpu_custom_call.1} parent=1 // pred_check_branch
      %20 = sbr.rel (0) target = $region21
    $region20: #{tpu_custom_call.1} parent=1 // pred_region
      _
    $region21: #{tpu_custom_call.1} parent=1 // pred_fallthru
      _
    %v21 = vld [vmem:[%s0] sm:$0xff]
    %v22 = vld [vmem:[%s1] sm:$0xff]
    %v23 = vld [vmem:[%s1 + $0x8] sm:$0xff]
    %v24 = vld [vmem:[%s1 + $0x10] sm:$0xff]
    %v25 = vld [vmem:[%s1 + $0x18] sm:$0xff]
    %v26 = vld [vmem:[%s2] sm:$0x1]
    %v28 = vperm.slane %v26, 0
    %vm30 = vcmask 261120
    %v32 = vsel %vm30, %v21, 0
    %34 = vmatpush.msra.mxu0 0.0
    %35 = vmatpush.msra.mxu0 0.0
    %36 = vmatpush.msra.mxu0 0.0
    %37 = vmatpush.msra.mxu0 0.0
    %38 = vmatpush.msra.mxu0 0.0
    %39 = vmatpush.msra.mxu0 0.0
    %40 = vmatpush.msra.mxu0 0.0
    %41 = vmatpush.msra.mxu0 0.0
    %42 = vmatpush.msra.mxu0 0.0
    %43 = vmatpush.msra.mxu0 0.0
    %44 = vmatpush.msra.mxu0 0.0
    %45 = vmatpush.msra.mxu0 0.0
    %46 = vmatpush.msra.mxu0 %v25
    %47 = vmatpush.msra.mxu0 %v24
    %48 = vmatpush.msra.mxu0 %v23
    %49 = vmatpush.msra.mxu0 %v22
    %50 = vmatmul.f32.gmra.mxu0 %v32
    %v51 = vpop.f32.mrf.mxu0
    %v52 = vadd.f32 %v28, %v51
    %53 = vdwg.mxu0
    %v54 = vmax.f32 %v52, 0.0
    %v55 = vld [vmem:[%s3] sm:$0xff]
    %v56 = vld [vmem:[%s3 + $0x8] sm:$0xff]
    %v57 = vld [vmem:[%s4] sm:$0x1]
    %v59 = vperm.slane %v57, 0
    %vm61 = vcmask 130048
    %v63 = vsel %vm61, %v54, 0
    %65 = vmatpush.msra.mxu0 0.0
    %66 = vmatpush.msra.mxu0 0.0
    %67 = vmatpush.msra.mxu0 0.0
    %68 = vmatpush.msra.mxu0 0.0
    %69 = vmatpush.msra.mxu0 0.0
    %70 = vmatpush.msra.mxu0 0.0
    %71 = vmatpush.msra.mxu0 0.0
    %72 = vmatpush.msra.mxu0 0.0
    %73 = vmatpush.msra.mxu0 0.0
    %74 = vmatpush.msra.mxu0 0.0
    %75 = vmatpush.msra.mxu0 0.0
    %76 = vmatpush.msra.mxu0 0.0
    %77 = vmatpush.msra.mxu0 0.0
    %78 = vmatpush.msra.mxu0 0.0
    %79 = vmatpush.msra.mxu0 %v56
    %80 = vmatpush.msra.mxu0 %v55
    %81 = vmatmul.f32.gmra.mxu0 %v63
    %v82 = vpop.f32.mrf.mxu0
    %v83 = vadd.f32 %v59, %v82
    %84 = vdwg.mxu0
    %85 = vmax.xlane.f32.xlu0 %v83
    %v86 = vpop.xlane.xlu0 %85
    %v87 = vsub.f32 %v83, %v86
    %v88 = vmul.f32 %v87, 1.442695
    %v89 = vpow.pop %v88
    %90 = vadd.xlane.f32.xlu0 %v89
    %v91 = vpop.xlane.xlu0 %90
    %v92 = vrcp.pop %v91
    %v93 = vmul.f32 %v91, %v92
    %v94 = vsub.f32 1.0, %v93
    %v95 = vmul.f32 %v92, %v94
    %v96 = vadd.f32 %v92, %v95
    %vm97 = vweird.f32 %v91
    %vm98 = vweird.f32 %v92
    %vm99 = vmor %vm97, %vm98
    %v100 = vsel %vm99, %v92, %v96
    %v101 = vand.u32 2147483647, %v91
    %vm102 = vcmp.eq.f32.partialorder %v101, 8.507059e+37
    %v103 = vand.u32 %v91, 2147483648
    %v104 = vor.u32 1.1754944e-38, %v103
    %v105 = vsel %vm102, %v104, %v100
    %v106 = vmul.f32 %v89, %v105
    %107 = vst [vmem:[#allocation2] sm:$0xff] %v106
    // Predicated region
    $region22: #{tpu_custom_call.1} parent=1 // pred_check
      _
    $region23: #{tpu_custom_call.1} parent=1 // pred_check_branch
      %109 = sbr.rel (0) target = $region25
    $region24: #{tpu_custom_call.1} parent=1 // pred_region
      %111 = vsyncadd [#allocation3], 0
      %s113 = sshll.u32 [#allocation2], 4
      %s114 = int_to_ptr.vmem [resolvable:$true] %s113
      %s115 = sshll.u32 %s5, 4
      %s116 = int_to_ptr.hbm [resolvable:$true] %s115
      %118 = dma.vmem_to_hbm [thread:$0]  %s114, 128, %s116, [#allocation3]
    $region25: #{tpu_custom_call.1} parent=1 // pred_fallthru
      _
    // Predicated region
    $region26: #{tpu_custom_call.1} parent=1 // pred_check
      _
    $region27: #{tpu_custom_call.1} parent=1 // pred_check_branch
      %120 = sbr.rel (0) target = $region29
    $region28: #{tpu_custom_call.1} parent=1 // pred_region
      %122 = dma.done [#allocation3], 128
    $region29: #{tpu_custom_call.1} parent=1 // pred_fallthru
      _
    %123 = vsyncpa [#allocation3], 1

</llo_original>
